<compile_context>
chip_gen: v5e
topology: v5e:2x2
jax: 0.10.0
libtpu: 0.0.40
codegen_flags: <defaults>
</compile_context>

<pallas_src>
import jax
import jax.numpy as jnp
from jax.experimental import pallas as pl
from jax.experimental.pallas import tpu as pltpu


_LANE = 128
_LANE_CANDIDATES = (2048, 1024, 512, 256, 128)
_MAX_LANE_BLOCK = 2048
# ~2 MiB blocks: ~90% of HBM roofline on v6e, safe on v5e's 16 MiB scoped
# VMEM default (2 in-bufs + 2 out-bufs = 8 MiB), and still fine on v7x.
_TARGET_BLOCK_BYTES = 2 << 20


def _copy_kernel(x_ref, o_ref):
    # Lane-dense full-tile copy: no reshape/transpose inside the kernel, so
    # this lowers to full-width vld/vst with no XLU traffic.
    o_ref[...] = x_ref[...]


def _round_down(v, m):
    return max(m, (v // m) * m)


def _choose_block(rows, cols, itemsize, sub):
    """Pick a (br, bc) block: bc lane-dense (128-multiple or full dim),
    br a multiple of the dtype-aware sublane packing (or full dim), sized so
    the block is ~_TARGET_BLOCK_BYTES."""
    if cols <= _LANE:
        bc = cols                                   # full dim -> always legal
    else:
        bc = min(_round_down(cols, _LANE), _MAX_LANE_BLOCK)

    if rows <= sub:
        br = rows                                   # full dim -> always legal
    else:
        want = max(sub, _TARGET_BLOCK_BYTES // max(1, bc * itemsize))
        br = min(_round_down(want, sub), _round_down(rows, sub))
    return br, bc


def _flatten_impl(x: jax.Array) -> jax.Array:
    """Pallas equivalent of `x.view(x.size(0), -1)`."""
    n = x.shape[0]
    flat = 1
    for d in x.shape[1:]:
        flat *= d
    total = n * flat

    itemsize = jnp.dtype(x.dtype).itemsize
    pack = max(1, 4 // itemsize)        # sublane packing: f32=1, bf16=2, i8=4
    sub = 8 * pack

    # Prefer a flat lane-dense slab (rows, lanes) decoupled from (N, C*H*W):
    # largest 128-multiple lane width that divides the total, ideally leaving
    # at least one full sublane tile of rows.
    lanes = None
    for c in _LANE_CANDIDATES:
        if total % c == 0 and total // c >= sub:
            lanes = c
            break
    if lanes is None:
        for c in _LANE_CANDIDATES:
            if total % c == 0:
                lanes = c
                break

    if lanes is not None:
        work_shape = (total // lanes, lanes)
    else:
        # Ragged fallback: fixed 128-multiple lane blocks + cdiv grid; Pallas
        # masks the edge instead of inflating the block to the whole axis.
        work_shape = (n, flat)

    x2 = jnp.reshape(x, work_shape)      # free metadata reshape in the wrapper
    rows, cols = work_shape
    br, bc = _choose_block(rows, cols, itemsize, sub)
    grid = (pl.cdiv(rows, br), pl.cdiv(cols, bc))

    y2 = pl.pallas_call(
        _copy_kernel,
        out_shape=jax.ShapeDtypeStruct(work_shape, x.dtype),
        grid_spec=pltpu.PrefetchScalarGridSpec(
            num_scalar_prefetch=0,
            grid=grid,
            in_specs=[pl.BlockSpec((br, bc), lambda i, j: (i, j))],
            out_specs=pl.BlockSpec((br, bc), lambda i, j: (i, j)),
        ),
        # Alias output onto the input slab: no second HBM buffer, and each
        # block is read before the same block is written, so this is safe.
        input_output_aliases={0: 0},
        compiler_params=pltpu.CompilerParams(
            dimension_semantics=("parallel", "parallel"),
        ),
    )(x2)

    return jnp.reshape(y2, (n, flat))    # free metadata reshape back


# jit so the wrapper reshapes are pure layout plumbing and the aliased
# operand is an intermediate (no defensive copy for the aliasing).
flatten = jax.jit(_flatten_impl)


if __name__ == "__main__":
    key = jax.random.PRNGKey(0)
    # Small NCHW input consistent with the module's forward.
    x = jax.random.normal(key, (2, 4, 16, 16), dtype=jnp.float32)

    y = flatten(x)
    jax.block_until_ready(y)

    y_ref = x.reshape(x.shape[0], -1)
    assert y.shape == (2, 4 * 16 * 16), y.shape
    assert y.dtype == x.dtype
    assert jnp.array_equal(y, y_ref), "mismatch vs reference flatten (f32)"

    # bf16: exercises the dtype-aware sublane tiling (sub = 16).
    xb = jax.random.normal(jax.random.PRNGKey(1), (2, 8, 8, 16)).astype(jnp.bfloat16)
    yb = flatten(xb)
    jax.block_until_ready(yb)
    assert jnp.array_equal(yb, xb.reshape(xb.shape[0], -1)), "mismatch (bf16)"

    # Odd shape: exercises the cdiv grid + masked ragged-edge fallback path.
    xr = jax.random.normal(jax.random.PRNGKey(2), (3, 5, 7, 9), dtype=jnp.float32)
    yr = flatten(xr)
    jax.block_until_ready(yr)
    assert jnp.array_equal(yr, xr.reshape(xr.shape[0], -1)), "mismatch (ragged)"

    print("KERNEL_OK")
</pallas_src>

<mosaic_0001>
module attributes {stable_mosaic.version = 11 : i64} {
  func.func @_copy_kernel(%arg0: i32, %arg1: i32, %arg2: memref<8x256xf32, #tpu.memory_space<vmem>>, %arg3: memref<8x256xf32, #tpu.memory_space<vmem>>) attributes {dimension_semantics = [#tpu.dimension_semantics<parallel>, #tpu.dimension_semantics<parallel>], iteration_bounds = array<i64: 1, 1>, scalar_prefetch = 0 : i64, scratch_operands = 0 : i64, tpu.core_type = #tpu.core_type<tc>, window_params = [{transform_indices = @transform_0, window_bounds = array<i64: 8, 256>}, {transform_indices = @transform_1, window_bounds = array<i64: 8, 256>}]} {
    %c0 = arith.constant 0 : index
    %c0_0 = arith.constant 0 : index
    %0 = vector.load %arg2[%c0, %c0_0] : memref<8x256xf32, #tpu.memory_space<vmem>>, vector<8x256xf32>
    %c0_1 = arith.constant 0 : index
    %c0_2 = arith.constant 0 : index
    %1 = vector.load %arg3[%c0_1, %c0_2] : memref<8x256xf32, #tpu.memory_space<vmem>>, vector<8x256xf32>
    tpu.vector_store %arg3[%c0_1, %c0_2], %0 {strides = array<i32>} : memref<8x256xf32, #tpu.memory_space<vmem>>, vector<8x256xf32>,
    return
  }
  func.func @transform_0(%arg0: i32, %arg1: i32) -> (i32, i32) {
    %c0_i32 = arith.constant 0 : i32
    return %arg0, %arg1 : i32, i32
  }
  func.func @transform_1(%arg0: i32, %arg1: i32) -> (i32, i32) {
    %c0_i32 = arith.constant 0 : i32
    return %arg0, %arg1 : i32, i32
  }
}

</mosaic_0001>

<llo_original>
// kernel: _flatten_impl.1
$region0: #{_flatten_impl.1}
  #allocation0 [shape = 'u32[]', space=smem, size = 0x4, offset = 0x4, fixed_abs, tag = 'smem constant byte address 0x4 - core index']
  #allocation1 [shape = 'u32[72,128]{1,0:T(1,128)}', space=vmem, size = 0x9000, scoped, tag = 'internal scratch']
  %s0 = inlined_call_operand.vmem [shape: f32[8,256], index: 0, kind: input, shape index: {}, may-alias: {0,1}]
  %s1 = inlined_call_operand.vmem [shape: f32[8,256], index: 1, kind: output, shape index: {}, may-alias: {0,1}]
  %s2 = sld [smem:[#allocation0]]
  $region14: #{_flatten_impl.1} parent=0
    _
  %s4 = ssub.s32 1, %s2
  %s5 = scalar_select 0, %s4, %s2
  // Predicated region
  $region2: #{_flatten_impl.1} parent=0 // pred_check
    _
  $region3: #{_flatten_impl.1} parent=0 // pred_check_branch
    %7 = sbr.rel (0) target = $region5
  $region4: #{_flatten_impl.1} parent=0 // pred_region
    _
  $region5: #{_flatten_impl.1} parent=0 // pred_fallthru
    _
  %v8 = vld [vmem:[%s0] sm:$0xff]
  %v9 = vld [vmem:[%s0 + $0x8] sm:$0xff]
  %10 = vst [vmem:[%s1] sm:$0xff] %v8
  %11 = vst [vmem:[%s1 + $0x8] sm:$0xff] %v9
  // Predicated region
  $region6: #{_flatten_impl.1} parent=0 // pred_check
    _
  $region7: #{_flatten_impl.1} parent=0 // pred_check_branch
    %13 = sbr.rel (0) target = $region9
  $region8: #{_flatten_impl.1} parent=0 // pred_region
    _
  $region9: #{_flatten_impl.1} parent=0 // pred_fallthru
    _
  // Predicated region
  $region10: #{_flatten_impl.1} parent=0 // pred_check
    _
  $region11: #{_flatten_impl.1} parent=0 // pred_check_branch
    %15 = sbr.rel (0) target = $region13
  $region12: #{_flatten_impl.1} parent=0 // pred_region
    _
  $region13: #{_flatten_impl.1} parent=0 // pred_fallthru
    _

</llo_original>
